<compile_context>
chip_gen: v6e
topology: v6e:2x2x1
jax: 0.10.0
libtpu: 0.0.40
codegen_flags: <defaults>
</compile_context>

<pallas_src>
import functools

import jax
import jax.numpy as jnp
from jax.experimental import pallas as pl
from jax.experimental.pallas import tpu as pltpu


def _round_up(x: int, m: int) -> int:
    return ((x + m - 1) // m) * m


def classifier_kernel(x_ref, w1_ref, w2_ref, o_ref):
    # First linear (no bias): (tb, D) @ (D, H) -> (tb, H), f32 accumulate on MXU.
    h = jnp.dot(x_ref[...], w1_ref[...], preferred_element_type=jnp.float32)
    # ReLU on the f32 accumulator.
    h = jnp.maximum(h, 0.0)
    # Dropout(0.5): identity in eval mode.
    # Second linear (no bias): (tb, H) @ (H, C) -> (tb, C).
    out = jnp.dot(h.astype(w2_ref.dtype), w2_ref[...],
                  preferred_element_type=jnp.float32)
    o_ref[...] = out.astype(o_ref.dtype)


@functools.partial(jax.jit, static_argnames=("tile_b", "param_dtype"))
def classifier_forward(x, w1_t, w2_t, *, tile_b: int = 4096, param_dtype=None):
    """Forward pass of `Classifier`.

    x:    (B, latent_dim)
    w1_t: (latent_dim, 32)   -- first Linear weight, stored transposed (in, out)
    w2_t: (32, out_label)    -- second Linear weight, stored transposed (in, out)
    param_dtype: optional storage dtype (e.g. jnp.bfloat16) for the HBM-facing
                 tensors; accumulation stays f32 inside the kernel.
    returns (B, out_label) in the storage dtype.
    """
    if param_dtype is not None:
        x = x.astype(param_dtype)
        w1_t = w1_t.astype(param_dtype)
        w2_t = w2_t.astype(param_dtype)

    B, D = x.shape
    H, C = w2_t.shape
    assert w1_t.shape == (D, H)

    # Sublane multiple for the block's second-to-last dim: 8 (f32), 16 (bf16), 32 (int8/fp8).
    itemsize = jnp.dtype(x.dtype).itemsize
    sub = 8 * max(1, 4 // itemsize)

    # Batch tile: as large as possible (amortize per-step overhead), but capped at
    # ~half the batch so v7x's two TensorCores each get >=1 step; always a sublane multiple.
    half = -(-B // 2)  # cdiv(B, 2)
    tb = min(_round_up(tile_b, sub), _round_up(half, sub))
    tb = max(tb, sub)
    grid = (pl.cdiv(B, tb),)  # ragged last block is handled by Pallas (clipped DMA)

    out_itemsize = itemsize
    cost = pl.CostEstimate(
        flops=2 * B * (D * H + H * C),
        transcendentals=0,
        bytes_accessed=(B * D * itemsize
                        + D * H * itemsize
                        + H * C * itemsize
                        + B * C * out_itemsize),
    )

    out = pl.pallas_call(
        classifier_kernel,
        out_shape=jax.ShapeDtypeStruct((B, C), x.dtype),
        grid=grid,
        in_specs=[
            # x: one batch tile per grid step (double-buffered by Pallas).
            pl.BlockSpec((tb, D), lambda i: (i, 0)),
            # weights: constant index_map -> hoisted / VMEM-resident.
            pl.BlockSpec((D, H), lambda i: (0, 0)),
            pl.BlockSpec((H, C), lambda i: (0, 0)),
        ],
        # Unpadded, lane-narrow output block: C equals the full array dim, so this
        # is a legal BlockSpec and writeback is only the useful bytes.
        out_specs=pl.BlockSpec((tb, C), lambda i: (i, 0)),
        compiler_params=pltpu.CompilerParams(
            dimension_semantics=("parallel",),  # shards batch tiles across TCs on v7x
        ),
        cost_estimate=cost,
    )(x, w1_t, w2_t)

    return out


def init_params(key, latent_dim=64, hidden=32, out_label=10, dtype=jnp.float32):
    """Deterministic init mimicking PyTorch's default Linear init:
    U(-1/sqrt(fan_in), 1/sqrt(fan_in)). Stored transposed (in, out)."""
    k1, k2 = jax.random.split(key)
    bound1 = 1.0 / (latent_dim ** 0.5)
    bound2 = 1.0 / (hidden ** 0.5)
    w1_t = jax.random.uniform(k1, (latent_dim, hidden), dtype,
                              minval=-bound1, maxval=bound1)
    w2_t = jax.random.uniform(k2, (hidden, out_label), dtype,
                              minval=-bound2, maxval=bound2)
    return w1_t, w2_t


def _reference(x, w1_t, w2_t):
    # Pure-JAX reference of the same forward pass (eval-mode dropout = identity).
    return jnp.maximum(x @ w1_t, 0.0) @ w2_t


if __name__ == "__main__":
    key = jax.random.PRNGKey(0)
    k_x, k_w, k_x2 = jax.random.split(key, 3)

    latent_dim, hidden, out_label = 64, 32, 10
    w1_t, w2_t = init_params(k_w, latent_dim, hidden, out_label)

    # Small batch (single tile, block larger than batch).
    B = 8
    x = jax.random.normal(k_x, (B, latent_dim), dtype=jnp.float32)
    out = jax.block_until_ready(classifier_forward(x, w1_t, w2_t))
    ref = _reference(x, w1_t, w2_t)
    assert out.shape == (B, out_label)
    assert jnp.allclose(out, ref, atol=1e-5, rtol=1e-5)

    # Larger batch with a small tile to exercise the ragged batch grid
    # (3 grid steps, last block partially out of bounds -> clipped DMA path).
    B2 = 20
    x2 = jax.random.normal(k_x2, (B2, latent_dim), dtype=jnp.float32)
    out2 = jax.block_until_ready(classifier_forward(x2, w1_t, w2_t, tile_b=8))
    ref2 = _reference(x2, w1_t, w2_t)
    assert out2.shape == (B2, out_label)
    assert jnp.allclose(out2, ref2, atol=1e-5, rtol=1e-5)

    # bf16 storage path (halves HBM traffic; f32 accumulation inside the kernel).
    out3 = jax.block_until_ready(
        classifier_forward(x2, w1_t, w2_t, tile_b=8, param_dtype=jnp.bfloat16))
    assert out3.shape == (B2, out_label)
    assert jnp.allclose(out3.astype(jnp.float32), ref2, atol=5e-2, rtol=5e-2)

    print("KERNEL_OK")
</pallas_src>

<mosaic_0001>
module attributes {stable_mosaic.version = 11 : i64} {
  func.func @classifier_kernel(%arg0: i32, %arg1: memref<8x64xf32, #tpu.memory_space<vmem>>, %arg2: memref<64x32xf32, #tpu.memory_space<vmem>>, %arg3: memref<32x10xf32, #tpu.memory_space<vmem>>, %arg4: memref<8x10xf32, #tpu.memory_space<vmem>>) attributes {dimension_semantics = [#tpu.dimension_semantics<parallel>], iteration_bounds = array<i64: 1>, scalar_prefetch = 0 : i64, scratch_operands = 0 : i64, tpu.core_type = #tpu.core_type<tc>, window_params = [{transform_indices = @transform_0, window_bounds = array<i64: 8, 64>}, {pipeline_mode = #tpu.pipeline_mode<synchronous>, transform_indices = @transform_1, window_bounds = array<i64: 64, 32>}, {pipeline_mode = #tpu.pipeline_mode<synchronous>, transform_indices = @transform_2, window_bounds = array<i64: 32, 10>}, {transform_indices = @transform_3, window_bounds = array<i64: 8, 10>}]} {
    %c0 = arith.constant 0 : index
    %c0_0 = arith.constant 0 : index
    %0 = vector.load %arg1[%c0, %c0_0] : memref<8x64xf32, #tpu.memory_space<vmem>>, vector<8x64xf32>
    %c0_1 = arith.constant 0 : index
    %c0_2 = arith.constant 0 : index
    %1 = vector.load %arg2[%c0_1, %c0_2] : memref<64x32xf32, #tpu.memory_space<vmem>>, vector<64x32xf32>
    %cst = arith.constant dense<0.000000e+00> : vector<8x32xf32>
    %2 = tpu.matmul %0, %1, %cst {dimension_numbers = #tpu.dot_dimension_numbers<[1], [0], [0], [1], [0, 0, 1, 1], [], []>} : vector<8x64xf32>, vector<64x32xf32>, vector<8x32xf32> -> vector<8x32xf32>
    %cst_3 = arith.constant 0.000000e+00 : f32
    %3 = vector.broadcast %cst_3 : f32 to vector<8x32xf32>
    %4 = arith.maximumf %2, %3 : vector<8x32xf32>
    %c0_4 = arith.constant 0 : index
    %c0_5 = arith.constant 0 : index
    %5 = vector.load %arg3[%c0_4, %c0_5] : memref<32x10xf32, #tpu.memory_space<vmem>>, vector<32x10xf32>
    %cst_6 = arith.constant dense<0.000000e+00> : vector<8x10xf32>
    %6 = tpu.matmul %4, %5, %cst_6 {dimension_numbers = #tpu.dot_dimension_numbers<[1], [0], [0], [1], [0, 0, 1, 1], [], []>} : vector<8x32xf32>, vector<32x10xf32>, vector<8x10xf32> -> vector<8x10xf32>
    %c0_7 = arith.constant 0 : index
    %c0_8 = arith.constant 0 : index
    %7 = vector.load %arg4[%c0_7, %c0_8] : memref<8x10xf32, #tpu.memory_space<vmem>>, vector<8x10xf32>
    tpu.vector_store %arg4[%c0_7, %c0_8], %6 {strides = array<i32>} : memref<8x10xf32, #tpu.memory_space<vmem>>, vector<8x10xf32>,
    return
  }
  func.func @transform_0(%arg0: i32) -> (i32, i32) {
    %c0_i32 = arith.constant 0 : i32
    %c0_i32_0 = arith.constant 0 : i32
    return %arg0, %c0_i32 : i32, i32
  }
  func.func @transform_1(%arg0: i32) -> (i32, i32) {
    %c0_i32 = arith.constant 0 : i32
    %c0_i32_0 = arith.constant 0 : i32
    %c0_i32_1 = arith.constant 0 : i32
    return %c0_i32, %c0_i32_0 : i32, i32
  }
  func.func @transform_2(%arg0: i32) -> (i32, i32) {
    %c0_i32 = arith.constant 0 : i32
    %c0_i32_0 = arith.constant 0 : i32
    %c0_i32_1 = arith.constant 0 : i32
    return %c0_i32, %c0_i32_0 : i32, i32
  }
  func.func @transform_3(%arg0: i32) -> (i32, i32) {
    %c0_i32 = arith.constant 0 : i32
    %c0_i32_0 = arith.constant 0 : i32
    return %arg0, %c0_i32 : i32, i32
  }
}

</mosaic_0001>

<llo_original>
// kernel: classifier_forward.1
$region0: #{classifier_forward.1}
  #allocation0 [shape = 'u32[]', space=smem, size = 0x4, offset = 0x4, fixed_abs, tag = 'smem constant byte address 0x4 - core index']
  #allocation1 [shape = 'u32[144,128]{1,0:T(1,128)}', space=vmem, size = 0x12000, scoped, tag = 'internal scratch']
  %s0 = inlined_call_operand.vmem [shape: f32[8,64], index: 0, kind: input, shape index: {}]
  %s1 = inlined_call_operand.vmem [shape: f32[64,32], index: 1, kind: input, shape index: {}]
  %s2 = inlined_call_operand.vmem [shape: f32[32,10], index: 2, kind: input, shape index: {}]
  %s3 = inlined_call_operand.hbm [shape: f32[8,10], index: 3, kind: output, shape index: {}]
  %s4 = sld [smem:[#allocation0]]
  $region22: #{classifier_forward.1} parent=0
    _
  %s6 = ssub.s32 1, %s4
  %s7 = scalar_select 0, %s6, %s4
  $region1: #{classifier_forward.1} parent=0
    #allocation2 [shape = 'u8[4096]{0}', space=vmem, size = 0x1000, scoped, tag = 'output window, operand 0, single buffered']
    #allocation3 [shape = 's32[1]{0}', space=sflag, size = 0x4, scoped, tag = 'scoped memory for classifier_forward.1']
    %8 = vsyncpa [#allocation3], 0
    // Predicated region
    $region2: #{classifier_forward.1} parent=1 // pred_check
      _
    $region3: #{classifier_forward.1} parent=1 // pred_check_branch
      %10 = sbr.rel (0) target = $region5
    $region4: #{classifier_forward.1} parent=1 // pred_region
      _
    $region5: #{classifier_forward.1} parent=1 // pred_fallthru
      _
    // Predicated region
    $region6: #{classifier_forward.1} parent=1 // pred_check
      _
    $region7: #{classifier_forward.1} parent=1 // pred_check_branch
      %12 = sbr.rel (0) target = $region9
    $region8: #{classifier_forward.1} parent=1 // pred_region
      _
    $region9: #{classifier_forward.1} parent=1 // pred_fallthru
      _
    // Predicated region
    $region10: #{classifier_forward.1} parent=1 // pred_check
      _
    $region11: #{classifier_forward.1} parent=1 // pred_check_branch
      %14 = sbr.rel (0) target = $region13
    $region12: #{classifier_forward.1} parent=1 // pred_region
      _
    $region13: #{classifier_forward.1} parent=1 // pred_fallthru
      _
    %v15 = vld [vmem:[%s0] sm:$0xff]
    %v16 = vld [vmem:[%s1] sm:$0xff]
    %v17 = vld [vmem:[%s1 + $0x8] sm:$0xff]
    %v18 = vld [vmem:[%s1 + $0x10] sm:$0xff]
    %v19 = vld [vmem:[%s1 + $0x18] sm:$0xff]
    %v20 = vld [vmem:[%s1 + $0x20] sm:$0xff]
    %v21 = vld [vmem:[%s1 + $0x28] sm:$0xff]
    %v22 = vld [vmem:[%s1 + $0x30] sm:$0xff]
    %v23 = vld [vmem:[%s1 + $0x38] sm:$0xff]
    %vm24 = vcmask 523264
    %v26 = vsel %vm24, %v15, 0
    %28 = vmatprep.subr.mxu0 0.0
    %29 = vmatpush1.msra.mxu0 0.0
    %30 = vmatprep.subr.mxu0 0.0
    %31 = vmatpush1.msra.mxu0 0.0
    %32 = vmatprep.subr.mxu0 0.0
    %33 = vmatpush1.msra.mxu0 0.0
    %34 = vmatprep.subr.mxu0 0.0
    %35 = vmatpush1.msra.mxu0 0.0
    %36 = vmatprep.subr.mxu0 0.0
    %37 = vmatpush1.msra.mxu0 0.0
    %38 = vmatprep.subr.mxu0 0.0
    %39 = vmatpush1.msra.mxu0 0.0
    %40 = vmatprep.subr.mxu0 0.0
    %41 = vmatpush1.msra.mxu0 0.0
    %42 = vmatprep.subr.mxu0 0.0
    %43 = vmatpush1.msra.mxu0 0.0
    %44 = vmatprep.subr.mxu0 0.0
    %45 = vmatpush1.msra.mxu0 %v23
    %46 = vmatprep.subr.mxu0 0.0
    %47 = vmatpush1.msra.mxu0 %v22
    %48 = vmatprep.subr.mxu0 0.0
    %49 = vmatpush1.msra.mxu0 %v21
    %50 = vmatprep.subr.mxu0 0.0
    %51 = vmatpush1.msra.mxu0 %v20
    %52 = vmatprep.subr.mxu0 0.0
    %53 = vmatpush1.msra.mxu0 %v19
    %54 = vmatprep.subr.mxu0 0.0
    %55 = vmatpush1.msra.mxu0 %v18
    %56 = vmatprep.subr.mxu0 0.0
    %57 = vmatpush1.msra.mxu0 %v17
    %58 = vmatprep.subr.mxu0 0.0
    %59 = vmatpush1.msra.mxu0 %v16
    %60 = vmatprep.subr.mxu0 0.0
    %61 = vmatpush2.msra.mxu0 0.0
    %62 = vmatprep.subr.mxu0 0.0
    %63 = vmatpush2.msra.mxu0 0.0
    %64 = vmatprep.subr.mxu0 0.0
    %65 = vmatpush2.msra.mxu0 0.0
    %66 = vmatprep.subr.mxu0 0.0
    %67 = vmatpush2.msra.mxu0 0.0
    %68 = vmatprep.subr.mxu0 0.0
    %69 = vmatpush2.msra.mxu0 0.0
    %70 = vmatprep.subr.mxu0 0.0
    %71 = vmatpush2.msra.mxu0 0.0
    %72 = vmatprep.subr.mxu0 0.0
    %73 = vmatpush2.msra.mxu0 0.0
    %74 = vmatprep.subr.mxu0 0.0
    %75 = vmatpush2.msra.mxu0 0.0
    %76 = vmatprep.subr.mxu0 0.0
    %77 = vmatpush2.msra.mxu0 0.0
    %78 = vmatprep.subr.mxu0 0.0
    %79 = vmatpush2.msra.mxu0 0.0
    %80 = vmatprep.subr.mxu0 0.0
    %81 = vmatpush2.msra.mxu0 0.0
    %82 = vmatprep.subr.mxu0 0.0
    %83 = vmatpush2.msra.mxu0 0.0
    %84 = vmatprep.subr.mxu0 0.0
    %85 = vmatpush2.msra.mxu0 0.0
    %86 = vmatprep.subr.mxu0 0.0
    %87 = vmatpush2.msra.mxu0 0.0
    %88 = vmatprep.subr.mxu0 0.0
    %89 = vmatpush2.msra.mxu0 0.0
    %90 = vmatprep.subr.mxu0 0.0
    %91 = vmatpush2.msra.mxu0 0.0
    %92 = vmatprep.mubr.f32.mxu0 0.0
    %93 = vmatmul.mubr.f32.gmra.mxu0 %v26
    %v94 = vpop.f32.mrf.mxu0
    %v95 = vadd.f32 0.0, %v94
    %v96 = vpop.f32.mrf.mxu0
    %97 = vdwg.mxu0
    %v98 = vmax.f32 %v95, 0.0
    %v99 = vld [vmem:[%s2] sm:$0xff]
    %v100 = vld [vmem:[%s2 + $0x8] sm:$0xff]
    %v101 = vld [vmem:[%s2 + $0x10] sm:$0xff]
    %v102 = vld [vmem:[%s2 + $0x18] sm:$0xff]
    %vm103 = vcmask 261120
    %v105 = vsel %vm103, %v98, 0
    %107 = vmatprep.subr.mxu0 0.0
    %108 = vmatpush1.msra.mxu0 0.0
    %109 = vmatprep.subr.mxu0 0.0
    %110 = vmatpush1.msra.mxu0 0.0
    %111 = vmatprep.subr.mxu0 0.0
    %112 = vmatpush1.msra.mxu0 0.0
    %113 = vmatprep.subr.mxu0 0.0
    %114 = vmatpush1.msra.mxu0 0.0
    %115 = vmatprep.subr.mxu0 0.0
    %116 = vmatpush1.msra.mxu0 0.0
    %117 = vmatprep.subr.mxu0 0.0
    %118 = vmatpush1.msra.mxu0 0.0
    %119 = vmatprep.subr.mxu0 0.0
    %120 = vmatpush1.msra.mxu0 0.0
    %121 = vmatprep.subr.mxu0 0.0
    %122 = vmatpush1.msra.mxu0 0.0
    %123 = vmatprep.subr.mxu0 0.0
    %124 = vmatpush1.msra.mxu0 0.0
    %125 = vmatprep.subr.mxu0 0.0
    %126 = vmatpush1.msra.mxu0 0.0
    %127 = vmatprep.subr.mxu0 0.0
    %128 = vmatpush1.msra.mxu0 0.0
    %129 = vmatprep.subr.mxu0 0.0
    %130 = vmatpush1.msra.mxu0 0.0
    %131 = vmatprep.subr.mxu0 0.0
    %132 = vmatpush1.msra.mxu0 %v102
    %133 = vmatprep.subr.mxu0 0.0
    %134 = vmatpush1.msra.mxu0 %v101
    %135 = vmatprep.subr.mxu0 0.0
    %136 = vmatpush1.msra.mxu0 %v100
    %137 = vmatprep.subr.mxu0 0.0
    %138 = vmatpush1.msra.mxu0 %v99
    %139 = vmatprep.subr.mxu0 0.0
    %140 = vmatpush2.msra.mxu0 0.0
    %141 = vmatprep.subr.mxu0 0.0
    %142 = vmatpush2.msra.mxu0 0.0
    %143 = vmatprep.subr.mxu0 0.0
    %144 = vmatpush2.msra.mxu0 0.0
    %145 = vmatprep.subr.mxu0 0.0
    %146 = vmatpush2.msra.mxu0 0.0
    %147 = vmatprep.subr.mxu0 0.0
    %148 = vmatpush2.msra.mxu0 0.0
    %149 = vmatprep.subr.mxu0 0.0
    %150 = vmatpush2.msra.mxu0 0.0
    %151 = vmatprep.subr.mxu0 0.0
    %152 = vmatpush2.msra.mxu0 0.0
    %153 = vmatprep.subr.mxu0 0.0
    %154 = vmatpush2.msra.mxu0 0.0
    %155 = vmatprep.subr.mxu0 0.0
    %156 = vmatpush2.msra.mxu0 0.0
    %157 = vmatprep.subr.mxu0 0.0
    %158 = vmatpush2.msra.mxu0 0.0
    %159 = vmatprep.subr.mxu0 0.0
    %160 = vmatpush2.msra.mxu0 0.0
    %161 = vmatprep.subr.mxu0 0.0
    %162 = vmatpush2.msra.mxu0 0.0
    %163 = vmatprep.subr.mxu0 0.0
    %164 = vmatpush2.msra.mxu0 0.0
    %165 = vmatprep.subr.mxu0 0.0
    %166 = vmatpush2.msra.mxu0 0.0
    %167 = vmatprep.subr.mxu0 0.0
    %168 = vmatpush2.msra.mxu0 0.0
    %169 = vmatprep.subr.mxu0 0.0
    %170 = vmatpush2.msra.mxu0 0.0
    %171 = vmatprep.mubr.f32.mxu0 0.0
    %172 = vmatmul.mubr.f32.gmra.mxu0 %v105
    %v173 = vpop.f32.mrf.mxu0
    %v174 = vadd.f32 0.0, %v173
    %v175 = vpop.f32.mrf.mxu0
    %176 = vdwg.mxu0
    %vm177 = vcmask 80896
    %178 = vst.msk [vmem:[#allocation2] sm:$0xff] %vm177, %v174
    // Predicated region
    $region14: #{classifier_forward.1} parent=1 // pred_check
      _
    $region15: #{classifier_forward.1} parent=1 // pred_check_branch
      %180 = sbr.rel (0) target = $region17
    $region16: #{classifier_forward.1} parent=1 // pred_region
      %s182 = ssub.s32 128, 128
      %183 = vsyncadd [#allocation3], %s182
      %s185 = sshll.u32 [#allocation2], 4
      %s186 = int_to_ptr.vmem [resolvable:$true] %s185
      %188 = dma.vmem_to_hbm [thread:$0]  %s186, 128, %s3, [#allocation3]
    $region17: #{classifier_forward.1} parent=1 // pred_fallthru
      _
    // Predicated region
    $region18: #{classifier_forward.1} parent=1 // pred_check
      _
    $region19: #{classifier_forward.1} parent=1 // pred_check_branch
      %190 = sbr.rel (0) target = $region21
    $region20: #{classifier_forward.1} parent=1 // pred_region
      %191 = dma.done [#allocation3], 128
    $region21: #{classifier_forward.1} parent=1 // pred_fallthru
      _
    %192 = vsyncpa [#allocation3], 1

</llo_original>
